<compile_context>
chip_gen: v7x
topology: tpu7x:2x2x1
jax: 0.10.0
libtpu: 0.0.40
codegen_flags: <defaults>
</compile_context>

<pallas_src>
import functools

import jax
import jax.numpy as jnp
import numpy as np
from jax.experimental import pallas as pl
from jax.experimental.pallas import tpu as pltpu

_LANE = 128
_SUBLANE = 8


def _round_up(x, m):
    return ((x + m - 1) // m) * m


def _cdiv(a, b):
    return (a + b - 1) // b


def _vmem_capacity_bytes():
    """Generation-aware physical VMEM (v5e/v6e: 128 MiB, v7x: 64 MiB per TC)."""
    try:
        return int(pltpu.get_tpu_info().vmem_capacity_bytes)
    except Exception:
        return 64 * 1024 * 1024  # conservative (v7x) fallback if query unavailable


def _mlp_head_kernel(bias_offsets, bias_widths, x_ref, *refs):
    """Fused MLP head: Linear -> ReLU -> (Dropout = identity at eval) -> ... -> Linear.

    refs layout: w_0, ..., w_{L-1}, bias_buf_ref, out_ref.
    Activations/weights run in bf16 on the MXU with f32 accumulation (accepted
    precision tradeoff; see loosened tolerance in __main__).
    """
    num_linear = len(bias_offsets)
    out_ref = refs[-1]
    bias_ref = refs[-2]

    h = x_ref[...]  # already bf16 from the wrapper -> no per-step layer-0 cast
    for i in range(num_linear):
        w = refs[i][...]
        off = bias_offsets[i]
        width = bias_widths[i]
        b = bias_ref[:, off:off + width]                       # (1, width) f32
        if h.dtype != w.dtype:
            h = h.astype(w.dtype)                              # bf16 activations
        h = jnp.dot(h, w, preferred_element_type=jnp.float32) + b
        if i < num_linear - 1:
            h = jnp.maximum(h, 0.0)                            # ReLU
    out_ref[...] = h.astype(out_ref.dtype)


def prepare_ace_head_params(weights, biases, *, param_dtype=jnp.bfloat16):
    """One-time parameter preparation (pad / cast / fuse biases).

    weights[i]: (in_dim_i, out_dim_i)  (= PyTorch nn.Linear weight, transposed)
    biases[i]:  (out_dim_i,) or (1, out_dim_i)
    Do this once; params are static — do NOT redo per forward call.
    """
    assert len(weights) == len(biases)
    num_linear = len(weights)
    feature_size = int(weights[-1].shape[1])
    padded_feature = _round_up(feature_size, _LANE)   # keep 128 (not 256): generation-portable

    ws, bs = [], []
    for i, (w, b) in enumerate(zip(weights, biases)):
        b = jnp.reshape(b, (1, -1))
        if i == num_linear - 1 and padded_feature != feature_size:
            pad = padded_feature - feature_size
            w = jnp.pad(w, ((0, 0), (0, pad)))
            b = jnp.pad(b, ((0, 0), (0, pad)))
        ws.append(jnp.asarray(w, param_dtype))
        bs.append(jnp.asarray(b, jnp.float32))

    # Single concatenated, 128-aligned bias buffer -> one parameter DMA.
    widths = [int(w.shape[1]) for w in ws]
    seg = [_round_up(d, _LANE) for d in widths]
    offsets = [int(o) for o in np.cumsum([0] + seg[:-1])]
    total_bias = int(np.sum(seg))
    bias_buf = jnp.zeros((1, total_bias), jnp.float32)
    for off, b in zip(offsets, bs):
        bias_buf = jax.lax.dynamic_update_slice(bias_buf, b, (0, off))

    param_bytes = sum(int(np.prod(w.shape)) * np.dtype(param_dtype).itemsize for w in ws)
    param_bytes += total_bias * 4

    return dict(
        ws=tuple(ws),
        bias_buf=bias_buf,
        offsets=tuple(offsets),
        widths=tuple(widths),
        in_dim=int(weights[0].shape[0]),
        feature_size=feature_size,
        padded_feature=padded_feature,
        param_bytes=int(param_bytes),
    )


def _choose_tile(batch, block_batch, in_dim, padded_feature, out_itemsize,
                 param_bytes, vmem_budget):
    """Pick a batch tile that minimizes padding waste, keeps >=2 grid steps when
    there's enough work (v7x megacore), and fits the VMEM budget."""
    rows = _round_up(max(batch, _SUBLANE), _SUBLANE)
    n_steps = max(1, _cdiv(rows, block_batch))
    if n_steps < 2 and rows >= 2 * 256:
        n_steps = 2  # guarantee a step per TensorCore on v7x for mid/large batches
    tb = _round_up(_cdiv(rows, n_steps), _SUBLANE)

    def act_bytes(t):  # double-buffered bf16 input tile + output tile
        return 2 * (t * in_dim * 2 + t * padded_feature * out_itemsize)

    while tb > _SUBLANE and param_bytes + act_bytes(tb) > vmem_budget:
        tb = _round_up(_cdiv(tb, 2), _SUBLANE)
    return tb, act_bytes(tb)


def ace_mlp_head_apply(x, params, *, block_batch=512, out_dtype=jnp.float32):
    """AcE MLP head as a single fused, batch-gridded Pallas kernel.

    x: (B, D) float features from the frozen image encoder.
    Returns (B, feature_size) `out_dtype`.
    """
    batch, in_dim = int(x.shape[0]), int(x.shape[1])
    assert in_dim == params["in_dim"]
    ws = params["ws"]
    bias_buf = params["bias_buf"]
    feature_size = params["feature_size"]
    padded_feature = params["padded_feature"]
    param_bytes = params["param_bytes"]

    vmem_cap = _vmem_capacity_bytes()
    vmem_budget = int(0.70 * vmem_cap)   # resident params + activation tiles
    out_itemsize = np.dtype(out_dtype).itemsize

    tb, act_bytes = _choose_tile(batch, block_batch, in_dim, padded_feature,
                                 out_itemsize, param_bytes, vmem_budget)

    # With Buffered(1) on the parameters the residency cost is param_bytes (not 2x).
    # TODO(synk): if args.AcE_hidden_layers grows into the multi-thousand range,
    #             tile the K/N dims of the matmuls instead of holding whole
    #             weights resident (v7x has only 64 MiB physical VMEM).
    assert param_bytes + act_bytes <= vmem_budget, (
        "AcE head too large for resident-weight kernel on this TPU generation; "
        "tile K/N instead")

    padded_batch = _round_up(batch, tb)
    x = x.astype(jnp.bfloat16)          # halve the only batch-scaled HBM stream
    if padded_batch != batch:
        x = jnp.pad(x, ((0, padded_batch - batch), (0, 0)))

    grid = (padded_batch // tb,)

    def _resident_spec(shape):
        # Constant index_map + single buffer: parameter stays VMEM-resident,
        # and we don't burn VMEM double-buffering a DMA that never changes.
        return pl.BlockSpec(shape, lambda i: (0,) * len(shape),
                            pipeline_mode=pl.Buffered(buffer_count=1))

    in_specs = [pl.BlockSpec((tb, in_dim), lambda i: (i, 0))]
    in_specs += [_resident_spec(tuple(w.shape)) for w in ws]
    in_specs += [_resident_spec(tuple(bias_buf.shape))]
    out_spec = pl.BlockSpec((tb, padded_feature), lambda i: (i, 0))

    vmem_limit_bytes = int(min(int(0.9 * vmem_cap),
                               max(param_bytes + act_bytes + (8 << 20), 16 << 20)))

    kernel = functools.partial(_mlp_head_kernel, params["offsets"], params["widths"])
    out = pl.pallas_call(
        kernel,
        out_shape=jax.ShapeDtypeStruct((padded_batch, padded_feature), out_dtype),
        grid=grid,
        in_specs=in_specs,
        out_specs=out_spec,
        compiler_params=pltpu.CompilerParams(
            dimension_semantics=("parallel",),
            vmem_limit_bytes=vmem_limit_bytes),
    )(x, *ws, bias_buf)

    return out[:batch, :feature_size]


def ace_mlp_head(x, weights, biases, *, block_batch=512,
                 param_dtype=jnp.bfloat16, out_dtype=jnp.float32):
    """Convenience wrapper: prep params (once) then apply. Prefer calling
    prepare_ace_head_params once and ace_mlp_head_apply per batch in real use."""
    params = prepare_ace_head_params(weights, biases, param_dtype=param_dtype)
    return ace_mlp_head_apply(x, params, block_batch=block_batch, out_dtype=out_dtype)


def init_linear_params(key, in_dim, out_dim):
    """Deterministic init mimicking torch.nn.Linear defaults: U(-k, k), k = 1/sqrt(in_dim)."""
    k = 1.0 / np.sqrt(in_dim)
    kw, kb = jax.random.split(key)
    w = jax.random.uniform(kw, (in_dim, out_dim), jnp.float32, -k, k)
    b = jax.random.uniform(kb, (1, out_dim), jnp.float32, -k, k)
    return w, b


def reference_mlp_head(x, weights, biases):
    h = x
    for i, (w, b) in enumerate(zip(weights, biases)):
        h = h @ w + b
        if i < len(weights) - 1:
            h = jnp.maximum(h, 0.0)
    return h


if __name__ == "__main__":
    # Shapes implied by the module:
    #   image_features_dim = 768 (MAE ViT-B/16)
    #   args.AcE_hidden_layers = [256, 128]  (configurable; small choice here)
    #   args.AcE_feature_size  = 64
    IMAGE_FEATURES_DIM = 768
    HIDDEN_LAYERS = [256, 128]
    FEATURE_SIZE = 64
    BATCH = 8

    key = jax.random.PRNGKey(0)
    key, kx = jax.random.split(key)
    # Precomputed image-encoder features (stand-in for the frozen MAE output).
    x = jax.random.normal(kx, (BATCH, IMAGE_FEATURES_DIM), jnp.float32)

    layer_dims = [IMAGE_FEATURES_DIM] + HIDDEN_LAYERS + [FEATURE_SIZE]
    weights, biases = [], []
    for i in range(len(layer_dims) - 1):
        key, kl = jax.random.split(key)
        w, b = init_linear_params(kl, layer_dims[i], layer_dims[i + 1])
        weights.append(w)
        biases.append(b)

    # One-time parameter prep (pad / cast / fuse), then apply the kernel.
    params = prepare_ace_head_params(weights, biases)
    out = ace_mlp_head_apply(x, params)
    out = jax.block_until_ready(out)

    ref = reference_mlp_head(x, weights, biases)
    # bf16 activations/weights on the MXU with f32 accumulation: loosened
    # tolerance vs. the f32 reference is the accepted precision tradeoff.
    np.testing.assert_allclose(np.asarray(out), np.asarray(ref), rtol=5e-2, atol=5e-2)
    assert out.shape == (BATCH, FEATURE_SIZE)
    assert out.dtype == jnp.float32

    print("KERNEL_OK")
</pallas_src>

<mosaic_0001>
module attributes {stable_mosaic.version = 11 : i64} {
  func.func @_mlp_head_kernel(%arg0: i32, %arg1: memref<8x768xbf16, #tpu.memory_space<vmem>>, %arg2: memref<768x256xbf16, #tpu.memory_space<vmem>>, %arg3: memref<256x128xbf16, #tpu.memory_space<vmem>>, %arg4: memref<128x128xbf16, #tpu.memory_space<vmem>>, %arg5: memref<1x512xf32, #tpu.memory_space<vmem>>, %arg6: memref<8x128xf32, #tpu.memory_space<vmem>>) attributes {dimension_semantics = [#tpu.dimension_semantics<parallel>], iteration_bounds = array<i64: 1>, scalar_prefetch = 0 : i64, scratch_operands = 0 : i64, tpu.core_type = #tpu.core_type<tc>, window_params = [{transform_indices = @transform_0, window_bounds = array<i64: 8, 768>}, {pipeline_mode = #tpu.pipeline_mode<synchronous>, transform_indices = @transform_1, window_bounds = array<i64: 768, 256>}, {pipeline_mode = #tpu.pipeline_mode<synchronous>, transform_indices = @transform_2, window_bounds = array<i64: 256, 128>}, {pipeline_mode = #tpu.pipeline_mode<synchronous>, transform_indices = @transform_3, window_bounds = array<i64: 128, 128>}, {pipeline_mode = #tpu.pipeline_mode<synchronous>, transform_indices = @transform_4, window_bounds = array<i64: 1, 512>}, {transform_indices = @transform_5, window_bounds = array<i64: 8, 128>}]} {
    %c0 = arith.constant 0 : index
    %c0_0 = arith.constant 0 : index
    %0 = vector.load %arg1[%c0, %c0_0] : memref<8x768xbf16, #tpu.memory_space<vmem>>, vector<8x768xbf16>
    %c0_1 = arith.constant 0 : index
    %c0_2 = arith.constant 0 : index
    %1 = vector.load %arg2[%c0_1, %c0_2] : memref<768x256xbf16, #tpu.memory_space<vmem>>, vector<768x256xbf16>
    %c0_3 = arith.constant 0 : index
    %c0_4 = arith.constant 0 : index
    %2 = vector.load %arg5[%c0_3, %c0_4] : memref<1x512xf32, #tpu.memory_space<vmem>>, vector<1x256xf32>
    %cst = arith.constant dense<0.000000e+00> : vector<8x256xf32>
    %3 = tpu.matmul %0, %1, %cst {dimension_numbers = #tpu.dot_dimension_numbers<[1], [0], [0], [1], [0, 0, 1, 1], [], []>} : vector<8x768xbf16>, vector<768x256xbf16>, vector<8x256xf32> -> vector<8x256xf32>
    %4 = vector.broadcast %2 : vector<1x256xf32> to vector<8x256xf32>
    %5 = arith.addf %3, %4 : vector<8x256xf32>
    %cst_5 = arith.constant 0.000000e+00 : f32
    %6 = vector.broadcast %cst_5 : f32 to vector<8x256xf32>
    %7 = arith.maximumf %5, %6 : vector<8x256xf32>
    %c0_6 = arith.constant 0 : index
    %c0_7 = arith.constant 0 : index
    %8 = vector.load %arg3[%c0_6, %c0_7] : memref<256x128xbf16, #tpu.memory_space<vmem>>, vector<256x128xbf16>
    %c0_8 = arith.constant 0 : index
    %c256 = arith.constant 256 : index
    %9 = vector.load %arg5[%c0_8, %c256] : memref<1x512xf32, #tpu.memory_space<vmem>>, vector<1x128xf32>
    %10 = arith.truncf %7 : vector<8x256xf32> to vector<8x256xbf16>
    %cst_9 = arith.constant dense<0.000000e+00> : vector<8x128xf32>
    %11 = tpu.matmul %10, %8, %cst_9 {dimension_numbers = #tpu.dot_dimension_numbers<[1], [0], [0], [1], [0, 0, 1, 1], [], []>} : vector<8x256xbf16>, vector<256x128xbf16>, vector<8x128xf32> -> vector<8x128xf32>
    %12 = vector.broadcast %9 : vector<1x128xf32> to vector<8x128xf32>
    %13 = arith.addf %11, %12 : vector<8x128xf32>
    %cst_10 = arith.constant 0.000000e+00 : f32
    %14 = vector.broadcast %cst_10 : f32 to vector<8x128xf32>
    %15 = arith.maximumf %13, %14 : vector<8x128xf32>
    %c0_11 = arith.constant 0 : index
    %c0_12 = arith.constant 0 : index
    %16 = vector.load %arg4[%c0_11, %c0_12] : memref<128x128xbf16, #tpu.memory_space<vmem>>, vector<128x128xbf16>
    %c0_13 = arith.constant 0 : index
    %c384 = arith.constant 384 : index
    %17 = vector.load %arg5[%c0_13, %c384] : memref<1x512xf32, #tpu.memory_space<vmem>>, vector<1x128xf32>
    %18 = arith.truncf %15 : vector<8x128xf32> to vector<8x128xbf16>
    %cst_14 = arith.constant dense<0.000000e+00> : vector<8x128xf32>
    %19 = tpu.matmul %18, %16, %cst_14 {dimension_numbers = #tpu.dot_dimension_numbers<[1], [0], [0], [1], [0, 0, 1, 1], [], []>} : vector<8x128xbf16>, vector<128x128xbf16>, vector<8x128xf32> -> vector<8x128xf32>
    %20 = vector.broadcast %17 : vector<1x128xf32> to vector<8x128xf32>
    %21 = arith.addf %19, %20 : vector<8x128xf32>
    %c0_15 = arith.constant 0 : index
    %c0_16 = arith.constant 0 : index
    %22 = vector.load %arg6[%c0_15, %c0_16] : memref<8x128xf32, #tpu.memory_space<vmem>>, vector<8x128xf32>
    tpu.vector_store %arg6[%c0_15, %c0_16], %21 {strides = array<i32>} : memref<8x128xf32, #tpu.memory_space<vmem>>, vector<8x128xf32>,
    return
  }
  func.func @transform_0(%arg0: i32) -> (i32, i32) {
    %c0_i32 = arith.constant 0 : i32
    %c0_i32_0 = arith.constant 0 : i32
    return %arg0, %c0_i32 : i32, i32
  }
  func.func @transform_1(%arg0: i32) -> (i32, i32) {
    %c0_i32 = arith.constant 0 : i32
    %c0_i32_0 = arith.constant 0 : i32
    %c0_i32_1 = arith.constant 0 : i32
    return %c0_i32, %c0_i32_0 : i32, i32
  }
  func.func @transform_2(%arg0: i32) -> (i32, i32) {
    %c0_i32 = arith.constant 0 : i32
    %c0_i32_0 = arith.constant 0 : i32
    %c0_i32_1 = arith.constant 0 : i32
    return %c0_i32, %c0_i32_0 : i32, i32
  }
  func.func @transform_3(%arg0: i32) -> (i32, i32) {
    %c0_i32 = arith.constant 0 : i32
    %c0_i32_0 = arith.constant 0 : i32
    %c0_i32_1 = arith.constant 0 : i32
    return %c0_i32, %c0_i32_0 : i32, i32
  }
  func.func @transform_4(%arg0: i32) -> (i32, i32) {
    %c0_i32 = arith.constant 0 : i32
    %c0_i32_0 = arith.constant 0 : i32
    %c0_i32_1 = arith.constant 0 : i32
    return %c0_i32, %c0_i32_0 : i32, i32
  }
  func.func @transform_5(%arg0: i32) -> (i32, i32) {
    %c0_i32 = arith.constant 0 : i32
    %c0_i32_0 = arith.constant 0 : i32
    return %arg0, %c0_i32 : i32, i32
  }
}

</mosaic_0001>

<llo_original>
// kernel: tpu_custom_call.1
$region0: #{tpu_custom_call.1}
  #allocation0 [shape = 'u32[]', space=smem, size = 0x4, offset = 0x4, fixed_abs, tag = 'smem constant byte address 0x4 - core index']
  #allocation1 [shape = 'u32[144,128]{1,0:T(1,128)}', space=vmem, size = 0x12000, scoped, tag = 'internal scratch']
  %s0 = inlined_call_operand.hbm [shape: bf16[8,768], index: 0, kind: input, shape index: {}]
  %s1 = inlined_call_operand.hbm [shape: bf16[768,256], index: 1, kind: input, shape index: {}]
  %s2 = inlined_call_operand.hbm [shape: bf16[256,128], index: 2, kind: input, shape index: {}]
  %s3 = inlined_call_operand.hbm [shape: bf16[128,128], index: 3, kind: input, shape index: {}]
  %s4 = inlined_call_operand.vmem [shape: f32[1,512], index: 4, kind: input, shape index: {}]
  %s5 = inlined_call_operand.hbm [shape: f32[8,128], index: 5, kind: output, shape index: {}]
  %s6 = sld [smem:[#allocation0]]
  $region46: #{tpu_custom_call.1} parent=0
    _
  %s8 = ssub.s32 1, %s6
  %s9 = scalar_select 0, %s8, %s6
  $region1: #{tpu_custom_call.1} parent=0
    #allocation2 [shape = 'u8[12288]{0}', space=vmem, size = 0x3000, scoped, tag = 'input window, operand 0, single buffered']
    #allocation3 [shape = 's32[1]{0}', space=sflag, size = 0x4, scoped, tag = 'scoped memory for tpu_custom_call.1']
    #allocation4 [shape = 's32[1]{0}', space=sflag, size = 0x4, scoped, tag = 'scoped memory for tpu_custom_call.1']
    #allocation5 [shape = 'u8[393216]{0}', space=vmem, size = 0x60000, scoped, tag = 'input window, operand 1, single buffered']
    #allocation6 [shape = 's32[1]{0}', space=sflag, size = 0x4, scoped, tag = 'scoped memory for tpu_custom_call.1']
    #allocation7 [shape = 'u8[65536]{0}', space=vmem, size = 0x10000, scoped, tag = 'input window, operand 2, single buffered']
    #allocation8 [shape = 'u8[32768]{0}', space=vmem, size = 0x8000, scoped, tag = 'input window, operand 3, single buffered']
    #allocation9 [shape = 's32[1]{0}', space=sflag, size = 0x4, scoped, tag = 'scoped memory for tpu_custom_call.1']
    #allocation10 [shape = 'u8[4096]{0}', space=vmem, size = 0x1000, scoped, tag = 'output window, operand 0, single buffered']
    %10 = vsyncpa [#allocation3], 0
    %11 = vsyncpa [#allocation6], 0
    %12 = vsyncpa [#allocation9], 0
    %13 = vsyncpa [#allocation4], 0
    // Predicated region
    $region2: #{tpu_custom_call.1} parent=1 // pred_check
      _
    $region3: #{tpu_custom_call.1} parent=1 // pred_check_branch
      %15 = sbr.rel (0) target = $region5
    $region4: #{tpu_custom_call.1} parent=1 // pred_region
      %s17 = ssub.s32 384, 384
      %18 = vsyncadd [#allocation3], %s17
      %s20 = sshll.u32 [#allocation2], 4
      %s21 = int_to_ptr.vmem [resolvable:$true] %s20
      %23 = dma.hbm_to_vmem [thread:$0]  %s0, 384, %s21, [#allocation3]
    $region5: #{tpu_custom_call.1} parent=1 // pred_fallthru
      _
    // Predicated region
    $region6: #{tpu_custom_call.1} parent=1 // pred_check
      _
    $region7: #{tpu_custom_call.1} parent=1 // pred_check_branch
      %25 = sbr.rel (0) target = $region9
    $region8: #{tpu_custom_call.1} parent=1 // pred_region
      %s27 = ssub.s32 12288, 12288
      %28 = vsyncadd [#allocation6], %s27
      %s29 = sshll.u32 [#allocation5], 4
      %s30 = int_to_ptr.vmem [resolvable:$true] %s29
      %35 = dma.hbm_to_vmem [thread:$0]  %s1, 12288, %s30, [#allocation6], 128, 128, 8
    $region9: #{tpu_custom_call.1} parent=1 // pred_fallthru
      _
    // Predicated region
    $region10: #{tpu_custom_call.1} parent=1 // pred_check
      _
    $region11: #{tpu_custom_call.1} parent=1 // pred_check_branch
      %37 = sbr.rel (0) target = $region13
    $region12: #{tpu_custom_call.1} parent=1 // pred_region
      %s39 = ssub.s32 2048, 2048
      %40 = vsyncadd [#allocation6], %s39
      %s41 = sshll.u32 [#allocation7], 4
      %s42 = int_to_ptr.vmem [resolvable:$true] %s41
      %47 = dma.hbm_to_vmem [thread:$0]  %s2, 2048, %s42, [#allocation6], 64, 64, 4
    $region13: #{tpu_custom_call.1} parent=1 // pred_fallthru
      _
    // Predicated region
    $region14: #{tpu_custom_call.1} parent=1 // pred_check
      _
    $region15: #{tpu_custom_call.1} parent=1 // pred_check_branch
      %49 = sbr.rel (0) target = $region17
    $region16: #{tpu_custom_call.1} parent=1 // pred_region
      %s51 = ssub.s32 1024, 1024
      %52 = vsyncadd [#allocation9], %s51
      %s53 = sshll.u32 [#allocation8], 4
      %s54 = int_to_ptr.vmem [resolvable:$true] %s53
      %59 = dma.hbm_to_vmem [thread:$0]  %s3, 1024, %s54, [#allocation9], 64, 64, 4
    $region17: #{tpu_custom_call.1} parent=1 // pred_fallthru
      _
    // Predicated region
    $region18: #{tpu_custom_call.1} parent=1 // pred_check
      _
    $region19: #{tpu_custom_call.1} parent=1 // pred_check_branch
      %61 = sbr.rel (0) target = $region21
    $region20: #{tpu_custom_call.1} parent=1 // pred_region
      _
    $region21: #{tpu_custom_call.1} parent=1 // pred_fallthru
      _
    // Predicated region
    $region22: #{tpu_custom_call.1} parent=1 // pred_check
      _
    $region23: #{tpu_custom_call.1} parent=1 // pred_check_branch
      %63 = sbr.rel (0) target = $region25
    $region24: #{tpu_custom_call.1} parent=1 // pred_region
      %64 = dma.done [#allocation3], 384
    $region25: #{tpu_custom_call.1} parent=1 // pred_fallthru
      _
    // Predicated region
    $region26: #{tpu_custom_call.1} parent=1 // pred_check
      _
    $region27: #{tpu_custom_call.1} parent=1 // pred_check_branch
      %66 = sbr.rel (0) target = $region29
    $region28: #{tpu_custom_call.1} parent=1 // pred_region
      %67 = dma.done [#allocation6], 12288
    $region29: #{tpu_custom_call.1} parent=1 // pred_fallthru
      _
    // Predicated region
    $region30: #{tpu_custom_call.1} parent=1 // pred_check
      _
    $region31: #{tpu_custom_call.1} parent=1 // pred_check_branch
      %69 = sbr.rel (0) target = $region33
    $region32: #{tpu_custom_call.1} parent=1 // pred_region
      %70 = dma.done [#allocation6], 2048
    $region33: #{tpu_custom_call.1} parent=1 // pred_fallthru
      _
    // Predicated region
    $region34: #{tpu_custom_call.1} parent=1 // pred_check
      _
    $region35: #{tpu_custom_call.1} parent=1 // pred_check_branch
      %72 = sbr.rel (0) target = $region37
    $region36: #{tpu_custom_call.1} parent=1 // pred_region
      %73 = dma.done [#allocation9], 1024
    $region37: #{tpu_custom_call.1} parent=1 // pred_fallthru
      _
    %v75 = vld [vmem:[#allocation2] sm:$0xff]
    %v76 = vld [vmem:[#allocation2 + $0x8] sm:$0xff]
    %v77 = vld [vmem:[#allocation2 + $0x10] sm:$0xff]
    %v78 = vld [vmem:[#allocation5] sm:$0xff]
    %v79 = vld [vmem:[#allocation5 + $0x8] sm:$0xff]
    %v80 = vld [vmem:[#allocation5 + $0x10] sm:$0xff]
    %v81 = vld [vmem:[#allocation5 + $0x18] sm:$0xff]
    %v82 = vld [vmem:[#allocation5 + $0x20] sm:$0xff]
    %v83 = vld [vmem:[#allocation5 + $0x28] sm:$0xff]
    %v84 = vld [vmem:[#allocation5 + $0x30] sm:$0xff]
    %v85 = vld [vmem:[#allocation5 + $0x38] sm:$0xff]
    %v86 = vld [vmem:[#allocation5 + $0x40] sm:$0xff]
    %v87 = vld [vmem:[#allocation5 + $0x48] sm:$0xff]
    %v88 = vld [vmem:[#allocation5 + $0x50] sm:$0xff]
    %v89 = vld [vmem:[#allocation5 + $0x58] sm:$0xff]
    %v90 = vld [vmem:[#allocation5 + $0x60] sm:$0xff]
    %v91 = vld [vmem:[#allocation5 + $0x68] sm:$0xff]
    %v92 = vld [vmem:[#allocation5 + $0x70] sm:$0xff]
    %v93 = vld [vmem:[#allocation5 + $0x78] sm:$0xff]
    %v94 = vld [vmem:[#allocation5 + $0x80] sm:$0xff]
    %v95 = vld [vmem:[#allocation5 + $0x88] sm:$0xff]
    %v96 = vld [vmem:[#allocation5 + $0x90] sm:$0xff]
    %v97 = vld [vmem:[#allocation5 + $0x98] sm:$0xff]
    %v98 = vld [vmem:[#allocation5 + $0xa0] sm:$0xff]
    %v99 = vld [vmem:[#allocation5 + $0xa8] sm:$0xff]
    %v100 = vld [vmem:[#allocation5 + $0xb0] sm:$0xff]
    %v101 = vld [vmem:[#allocation5 + $0xb8] sm:$0xff]
    %v102 = vld [vmem:[#allocation5 + $0xc0] sm:$0xff]
    %v103 = vld [vmem:[#allocation5 + $0xc8] sm:$0xff]
    %v104 = vld [vmem:[#allocation5 + $0xd0] sm:$0xff]
    %v105 = vld [vmem:[#allocation5 + $0xd8] sm:$0xff]
    %v106 = vld [vmem:[#allocation5 + $0xe0] sm:$0xff]
    %v107 = vld [vmem:[#allocation5 + $0xe8] sm:$0xff]
    %v108 = vld [vmem:[#allocation5 + $0xf0] sm:$0xff]
    %v109 = vld [vmem:[#allocation5 + $0xf8] sm:$0xff]
    %v110 = vld [vmem:[#allocation5 + $0x100] sm:$0xff]
    %v111 = vld [vmem:[#allocation5 + $0x108] sm:$0xff]
    %v112 = vld [vmem:[#allocation5 + $0x110] sm:$0xff]
    %v113 = vld [vmem:[#allocation5 + $0x118] sm:$0xff]
    %v114 = vld [vmem:[#allocation5 + $0x120] sm:$0xff]
    %v115 = vld [vmem:[#allocation5 + $0x128] sm:$0xff]
    %v116 = vld [vmem:[#allocation5 + $0x130] sm:$0xff]
    %v117 = vld [vmem:[#allocation5 + $0x138] sm:$0xff]
    %v118 = vld [vmem:[#allocation5 + $0x140] sm:$0xff]
    %v119 = vld [vmem:[#allocation5 + $0x148] sm:$0xff]
    %v120 = vld [vmem:[#allocation5 + $0x150] sm:$0xff]
    %v121 = vld [vmem:[#allocation5 + $0x158] sm:$0xff]
    %v122 = vld [vmem:[#allocation5 + $0x160] sm:$0xff]
    %v123 = vld [vmem:[#allocation5 + $0x168] sm:$0xff]
    %v124 = vld [vmem:[#allocation5 + $0x170] sm:$0xff]
    %v125 = vld [vmem:[#allocation5 + $0x178] sm:$0xff]
    %v126 = vld [vmem:[#allocation5 + $0x180] sm:$0xff]
    %v127 = vld [vmem:[#allocation5 + $0x188] sm:$0xff]
    %v128 = vld [vmem:[#allocation5 + $0x190] sm:$0xff]
    %v129 = vld [vmem:[#allocation5 + $0x198] sm:$0xff]
    %v130 = vld [vmem:[#allocation5 + $0x1a0] sm:$0xff]
    %v131 = vld [vmem:[#allocation5 + $0x1a8] sm:$0xff]
    %v132 = vld [vmem:[#allocation5 + $0x1b0] sm:$0xff]
    %v133 = vld [vmem:[#allocation5 + $0x1b8] sm:$0xff]
    %v134 = vld [vmem:[#allocation5 + $0x1c0] sm:$0xff]
    %v135 = vld [vmem:[#allocation5 + $0x1c8] sm:$0xff]
    %v136 = vld [vmem:[#allocation5 + $0x1d0] sm:$0xff]
    %v137 = vld [vmem:[#allocation5 + $0x1d8] sm:$0xff]
    %v138 = vld [vmem:[#allocation5 + $0x1e0] sm:$0xff]
    %v139 = vld [vmem:[#allocation5 + $0x1e8] sm:$0xff]
    %v140 = vld [vmem:[#allocation5 + $0x1f0] sm:$0xff]
    %v141 = vld [vmem:[#allocation5 + $0x1f8] sm:$0xff]
    %v142 = vld [vmem:[#allocation5 + $0x200] sm:$0xff]
    %v143 = vld [vmem:[#allocation5 + $0x208] sm:$0xff]
    %v144 = vld [vmem:[#allocation5 + $0x210] sm:$0xff]
    %v145 = vld [vmem:[#allocation5 + $0x218] sm:$0xff]
    %v146 = vld [vmem:[#allocation5 + $0x220] sm:$0xff]
    %v147 = vld [vmem:[#allocation5 + $0x228] sm:$0xff]
    %v148 = vld [vmem:[#allocation5 + $0x230] sm:$0xff]
    %v149 = vld [vmem:[#allocation5 + $0x238] sm:$0xff]
    %v150 = vld [vmem:[#allocation5 + $0x240] sm:$0xff]
    %v151 = vld [vmem:[#allocation5 + $0x248] sm:$0xff]
    %v152 = vld [vmem:[#allocation5 + $0x250] sm:$0xff]
    %v153 = vld [vmem:[#allocation5 + $0x258] sm:$0xff]
    %v154 = vld [vmem:[#allocation5 + $0x260] sm:$0xff]
    %v155 = vld [vmem:[#allocation5 + $0x268] sm:$0xff]
    %v156 = vld [vmem:[#allocation5 + $0x270] sm:$0xff]
    %v157 = vld [vmem:[#allocation5 + $0x278] sm:$0xff]
    %v158 = vld [vmem:[#allocation5 + $0x280] sm:$0xff]
    %v159 = vld [vmem:[#allocation5 + $0x288] sm:$0xff]
    %v160 = vld [vmem:[#allocation5 + $0x290] sm:$0xff]
    %v161 = vld [vmem:[#allocation5 + $0x298] sm:$0xff]
    %v162 = vld [vmem:[#allocation5 + $0x2a0] sm:$0xff]
    %v163 = vld [vmem:[#allocation5 + $0x2a8] sm:$0xff]
    %v164 = vld [vmem:[#allocation5 + $0x2b0] sm:$0xff]
    %v165 = vld [vmem:[#allocation5 + $0x2b8] sm:$0xff]
    %v166 = vld [vmem:[#allocation5 + $0x2c0] sm:$0xff]
    %v167 = vld [vmem:[#allocation5 + $0x2c8] sm:$0xff]
    %v168 = vld [vmem:[#allocation5 + $0x2d0] sm:$0xff]
    %v169 = vld [vmem:[#allocation5 + $0x2d8] sm:$0xff]
    %v170 = vld [vmem:[#allocation5 + $0x2e0] sm:$0xff]
    %v171 = vld [vmem:[#allocation5 + $0x2e8] sm:$0xff]
    %v172 = vld [vmem:[#allocation5 + $0x2f0] sm:$0xff]
    %v173 = vld [vmem:[#allocation5 + $0x2f8] sm:$0xff]
    %v174 = vld [vmem:[%s4] sm:$0x3]
    %v176 = vlaneseq
    %v177 = vshrl.u32 %v176, 7
    %v178 = vsub.s32 0, %v177
    %v179 = vrot.slane %v174, %v178
    %v180 = vlaneseq
    %v181 = vshrl.u32 %v180, 7
    %v182 = vsub.s32 1, %v181
    %v183 = vrot.slane %v174, %v182
    %v189 = vunpack.c.l.b16 %v75
    %v190 = vunpack.c.h.b16 %v75
    %v191 = vunpack.c.l.b16 %v76
    %v192 = vunpack.c.h.b16 %v76
    %v193 = vunpack.c.l.b16 %v77
    %v194 = vunpack.c.h.b16 %v77
    %v195 = vpack.c.b16 %v189, %v189
    %v196 = vpack.c.b16 %v190, %v190
    %v197 = vpack.c.b16 %v191, %v191
    %v198 = vpack.c.b16 %v192, %v192
    %v199 = vpack.c.b16 %v193, %v193
    %v200 = vpack.c.b16 %v194, %v194
    %v303 = vunpack.c.l.b16 %v78
    %v304 = vunpack.c.h.b16 %v78
    %v305 = vunpack.c.l.b16 %v79
    %v306 = vunpack.c.h.b16 %v79
    %v307 = vunpack.c.l.b16 %v80
    %v308 = vunpack.c.h.b16 %v80
    %v309 = vunpack.c.l.b16 %v81
    %v310 = vunpack.c.h.b16 %v81
    %v311 = vunpack.c.l.b16 %v82
    %v312 = vunpack.c.h.b16 %v82
    %v313 = vunpack.c.l.b16 %v83
    %v314 = vunpack.c.h.b16 %v83
    %v315 = vunpack.c.l.b16 %v84
    %v316 = vunpack.c.h.b16 %v84
    %v317 = vunpack.c.l.b16 %v85
    %v318 = vunpack.c.h.b16 %v85
    %v319 = vunpack.c.l.b16 %v86
    %v320 = vunpack.c.h.b16 %v86
    %v321 = vunpack.c.l.b16 %v87
    %v322 = vunpack.c.h.b16 %v87
    %v323 = vunpack.c.l.b16 %v88
    %v324 = vunpack.c.h.b16 %v88
    %v325 = vunpack.c.l.b16 %v89
    %v326 = vunpack.c.h.b16 %v89
    %v327 = vunpack.c.l.b16 %v90
    %v328 = vunpack.c.h.b16 %v90
    %v329 = vunpack.c.l.b16 %v91
    %v330 = vunpack.c.h.b16 %v91
    %v331 = vunpack.c.l.b16 %v92
    %v332 = vunpack.c.h.b16 %v92
    %v333 = vunpack.c.l.b16 %v93
    %v334 = vunpack.c.h.b16 %v93
    %v335 = vunpack.c.l.b16 %v94
    %v336 = vunpack.c.h.b16 %v94
    %v337 = vunpack.c.l.b16 %v95
    %v338 = vunpack.c.h.b16 %v95
    %v339 = vunpack.c.l.b16 %v96
    %v340 = vunpack.c.h.b16 %v96
    %v341 = vunpack.c.l.b16 %v97
    %v342 = vunpack.c.h.b16 %v97
    %v343 = vunpack.c.l.b16 %v98
    %v344 = vunpack.c.h.b16 %v98
    %v345 = vunpack.c.l.b16 %v99
    %v346 = vunpack.c.h.b16 %v99
    %v347 = vunpack.c.l.b16 %v100
    %v348 = vunpack.c.h.b16 %v100
    %v349 = vunpack.c.l.b16 %v101
    %v350 = vunpack.c.h.b16 %v101
    %v351 = vunpack.c.l.b16 %v102
    %v352 = vunpack.c.h.b16 %v102
    %v353 = vunpack.c.l.b16 %v103
    %v354 = vunpack.c.h.b16 %v103
    %v355 = vunpack.c.l.b16 %v104
    %v356 = vunpack.c.h.b16 %v104
    %v357 = vunpack.c.l.b16 %v105
    %v358 = vunpack.c.h.b16 %v105
    %v359 = vunpack.c.l.b16 %v106
    %v360 = vunpack.c.h.b16 %v106
    %v361 = vunpack.c.l.b16 %v107
    %v362 = vunpack.c.h.b16 %v107
    %v363 = vunpack.c.l.b16 %v108
    %v364 = vunpack.c.h.b16 %v108
    %v365 = vunpack.c.l.b16 %v109
    %v366 = vunpack.c.h.b16 %v109
    %v367 = vunpack.c.l.b16 %v110
    %v368 = vunpack.c.h.b16 %v110
    %v369 = vunpack.c.l.b16 %v111
    %v370 = vunpack.c.h.b16 %v111
    %v371 = vunpack.c.l.b16 %v112
    %v372 = vunpack.c.h.b16 %v112
    %v373 = vunpack.c.l.b16 %v113
    %v374 = vunpack.c.h.b16 %v113
    %v375 = vunpack.c.l.b16 %v114
    %v376 = vunpack.c.h.b16 %v114
    %v377 = vunpack.c.l.b16 %v115
    %v378 = vunpack.c.h.b16 %v115
    %v379 = vunpack.c.l.b16 %v116
    %v380 = vunpack.c.h.b16 %v116
    %v381 = vunpack.c.l.b16 %v117
    %v382 = vunpack.c.h.b16 %v117
    %v383 = vunpack.c.l.b16 %v118
    %v384 = vunpack.c.h.b16 %v118
    %v385 = vunpack.c.l.b16 %v119
    %v386 = vunpack.c.h.b16 %v119
    %v387 = vunpack.c.l.b16 %v120
    %v388 = vunpack.c.h.b16 %v120
    %v389 = vunpack.c.l.b16 %v121
    %v390 = vunpack.c.h.b16 %v121
    %v391 = vunpack.c.l.b16 %v122
    %v392 = vunpack.c.h.b16 %v122
    %v393 = vunpack.c.l.b16 %v123
    %v394 = vunpack.c.h.b16 %v123
    %v395 = vunpack.c.l.b16 %v124
    %v396 = vunpack.c.h.b16 %v124
    %v397 = vunpack.c.l.b16 %v125
    %v398 = vunpack.c.h.b16 %v125
    %v399 = vunpack.c.l.b16 %v126
    %v400 = vunpack.c.h.b16 %v126
    %v401 = vunpack.c.l.b16 %v127
    %v402 = vunpack.c.h.b16 %v127
    %v403 = vunpack.c.l.b16 %v128
    %v404 = vunpack.c.h.b16 %v128
    %v405 = vunpack.c.l.b16 %v129
    %v406 = vunpack.c.h.b16 %v129
    %v407 = vunpack.c.l.b16 %v130
    %v408 = vunpack.c.h.b16 %v130
    %v409 = vunpack.c.l.b16 %v131
    %v410 = vunpack.c.h.b16 %v131
    %v411 = vunpack.c.l.b16 %v132
    %v412 = vunpack.c.h.b16 %v132
    %v413 = vunpack.c.l.b16 %v133
    %v414 = vunpack.c.h.b16 %v133
    %v415 = vunpack.c.l.b16 %v134
    %v416 = vunpack.c.h.b16 %v134
    %v417 = vunpack.c.l.b16 %v135
    %v418 = vunpack.c.h.b16 %v135
    %v419 = vunpack.c.l.b16 %v136
    %v420 = vunpack.c.h.b16 %v136
    %v421 = vunpack.c.l.b16 %v137
    %v422 = vunpack.c.h.b16 %v137
    %v423 = vunpack.c.l.b16 %v138
    %v424 = vunpack.c.h.b16 %v138
    %v425 = vunpack.c.l.b16 %v139
    %v426 = vunpack.c.h.b16 %v139
    %v427 = vunpack.c.l.b16 %v140
    %v428 = vunpack.c.h.b16 %v140
    %v429 = vunpack.c.l.b16 %v141
    %v430 = vunpack.c.h.b16 %v141
    %v431 = vunpack.c.l.b16 %v142
    %v432 = vunpack.c.h.b16 %v142
    %v433 = vunpack.c.l.b16 %v143
    %v434 = vunpack.c.h.b16 %v143
    %v435 = vunpack.c.l.b16 %v144
    %v436 = vunpack.c.h.b16 %v144
    %v437 = vunpack.c.l.b16 %v145
    %v438 = vunpack.c.h.b16 %v145
    %v439 = vunpack.c.l.b16 %v146
    %v440 = vunpack.c.h.b16 %v146
    %v441 = vunpack.c.l.b16 %v147
    %v442 = vunpack.c.h.b16 %v147
    %v443 = vunpack.c.l.b16 %v148
    %v444 = vunpack.c.h.b16 %v148
    %v445 = vunpack.c.l.b16 %v149
    %v446 = vunpack.c.h.b16 %v149
    %v447 = vunpack.c.l.b16 %v150
    %v448 = vunpack.c.h.b16 %v150
    %v449 = vunpack.c.l.b16 %v151
    %v450 = vunpack.c.h.b16 %v151
    %v451 = vunpack.c.l.b16 %v152
    %v452 = vunpack.c.h.b16 %v152
    %v453 = vunpack.c.l.b16 %v153
    %v454 = vunpack.c.h.b16 %v153
    %v455 = vunpack.c.l.b16 %v154
    %v456 = vunpack.c.h.b16 %v154
    %v457 = vunpack.c.l.b16 %v155
    %v458 = vunpack.c.h.b16 %v155
    %v459 = vunpack.c.l.b16 %v156
    %v460 = vunpack.c.h.b16 %v156
    %v461 = vunpack.c.l.b16 %v157
    %v462 = vunpack.c.h.b16 %v157
    %v463 = vunpack.c.l.b16 %v158
    %v464 = vunpack.c.h.b16 %v158
    %v465 = vunpack.c.l.b16 %v159
    %v466 = vunpack.c.h.b16 %v159
    %v467 = vunpack.c.l.b16 %v160
    %v468 = vunpack.c.h.b16 %v160
    %v469 = vunpack.c.l.b16 %v161
    %v470 = vunpack.c.h.b16 %v161
    %v471 = vunpack.c.l.b16 %v162
    %v472 = vunpack.c.h.b16 %v162
    %v473 = vunpack.c.l.b16 %v163
    %v474 = vunpack.c.h.b16 %v163
    %v475 = vunpack.c.l.b16 %v164
    %v476 = vunpack.c.h.b16 %v164
    %v477 = vunpack.c.l.b16 %v165
    %v478 = vunpack.c.h.b16 %v165
    %v479 = vunpack.c.l.b16 %v166
    %v480 = vunpack.c.h.b16 %v166
    %v481 = vunpack.c.l.b16 %v167
    %v482 = vunpack.c.h.b16 %v167
    %v483 = vunpack.c.l.b16 %v168
    %v484 = vunpack.c.h.b16 %v168
    %v485 = vunpack.c.l.b16 %v169
    %v486 = vunpack.c.h.b16 %v169
    %v487 = vunpack.c.l.b16 %v170
    %v488 = vunpack.c.h.b16 %v170
    %v489 = vunpack.c.l.b16 %v171
    %v490 = vunpack.c.h.b16 %v171
    %v491 = vunpack.c.l.b16 %v172
    %v492 = vunpack.c.h.b16 %v172
    %v493 = vunpack.c.l.b16 %v173
    %v494 = vunpack.c.h.b16 %v173
    %v495 = vpack.c.b16 %v305, %v303
    %v496 = vpack.c.b16 %v306, %v304
    %v497 = vpack.c.b16 %v309, %v307
    %v498 = vpack.c.b16 %v310, %v308
    %v499 = vpack.c.b16 %v313, %v311
    %v500 = vpack.c.b16 %v314, %v312
    %v501 = vpack.c.b16 %v317, %v315
    %v502 = vpack.c.b16 %v318, %v316
    %v503 = vpack.c.b16 %v321, %v319
    %v504 = vpack.c.b16 %v322, %v320
    %v505 = vpack.c.b16 %v325, %v323
    %v506 = vpack.c.b16 %v326, %v324
    %v507 = vpack.c.b16 %v329, %v327
    %v508 = vpack.c.b16 %v330, %v328
    %v509 = vpack.c.b16 %v333, %v331
    %v510 = vpack.c.b16 %v334, %v332
    %v511 = vpack.c.b16 %v337, %v335
    %v512 = vpack.c.b16 %v338, %v336
    %v513 = vpack.c.b16 %v341, %v339
    %v514 = vpack.c.b16 %v342, %v340
    %v515 = vpack.c.b16 %v345, %v343
    %v516 = vpack.c.b16 %v346, %v344
    %v517 = vpack.c.b16 %v349, %v347
    %v518 = vpack.c.b16 %v350, %v348
    %v519 = vpack.c.b16 %v353, %v351
    %v520 = vpack.c.b16 %v354, %v352
    %v521 = vpack.c.b16 %v357, %v355
    %v522 = vpack.c.b16 %v358, %v356
    %v523 = vpack.c.b16 %v361, %v359
    %v524 = vpack.c.b16 %v362, %v360
    %v525 = vpack.c.b16 %v365, %v363
    %v526 = vpack.c.b16 %v366, %v364
    %v527 = vpack.c.b16 %v369, %v367
    %v528 = vpack.c.b16 %v370, %v368
    %v529 = vpack.c.b16 %v373, %v371
    %v530 = vpack.c.b16 %v374, %v372
    %v531 = vpack.c.b16 %v377, %v375
    %v532 = vpack.c.b16 %v378, %v376
    %v533 = vpack.c.b16 %v381, %v379
    %v534 = vpack.c.b16 %v382, %v380
    %v535 = vpack.c.b16 %v385, %v383
    %v536 = vpack.c.b16 %v386, %v384
    %v537 = vpack.c.b16 %v389, %v387
    %v538 = vpack.c.b16 %v390, %v388
    %v539 = vpack.c.b16 %v393, %v391
    %v540 = vpack.c.b16 %v394, %v392
    %v541 = vpack.c.b16 %v397, %v395
    %v542 = vpack.c.b16 %v398, %v396
    %v543 = vpack.c.b16 %v401, %v399
    %v544 = vpack.c.b16 %v402, %v400
    %v545 = vpack.c.b16 %v405, %v403
    %v546 = vpack.c.b16 %v406, %v404
    %v547 = vpack.c.b16 %v409, %v407
    %v548 = vpack.c.b16 %v410, %v408
    %v549 = vpack.c.b16 %v413, %v411
    %v550 = vpack.c.b16 %v414, %v412
    %v551 = vpack.c.b16 %v417, %v415
    %v552 = vpack.c.b16 %v418, %v416
    %v553 = vpack.c.b16 %v421, %v419
    %v554 = vpack.c.b16 %v422, %v420
    %v555 = vpack.c.b16 %v425, %v423
    %v556 = vpack.c.b16 %v426, %v424
    %v557 = vpack.c.b16 %v429, %v427
    %v558 = vpack.c.b16 %v430, %v428
    %v559 = vpack.c.b16 %v433, %v431
    %v560 = vpack.c.b16 %v434, %v432
    %v561 = vpack.c.b16 %v437, %v435
    %v562 = vpack.c.b16 %v438, %v436
    %v563 = vpack.c.b16 %v441, %v439
    %v564 = vpack.c.b16 %v442, %v440
    %v565 = vpack.c.b16 %v445, %v443
    %v566 = vpack.c.b16 %v446, %v444
    %v567 = vpack.c.b16 %v449, %v447
    %v568 = vpack.c.b16 %v450, %v448
    %v569 = vpack.c.b16 %v453, %v451
    %v570 = vpack.c.b16 %v454, %v452
    %v571 = vpack.c.b16 %v457, %v455
    %v572 = vpack.c.b16 %v458, %v456
    %v573 = vpack.c.b16 %v461, %v459
    %v574 = vpack.c.b16 %v462, %v460
    %v575 = vpack.c.b16 %v465, %v463
    %v576 = vpack.c.b16 %v466, %v464
    %v577 = vpack.c.b16 %v469, %v467
    %v578 = vpack.c.b16 %v470, %v468
    %v579 = vpack.c.b16 %v473, %v471
    %v580 = vpack.c.b16 %v474, %v472
    %v581 = vpack.c.b16 %v477, %v475
    %v582 = vpack.c.b16 %v478, %v476
    %v583 = vpack.c.b16 %v481, %v479
    %v584 = vpack.c.b16 %v482, %v480
    %v585 = vpack.c.b16 %v485, %v483
    %v586 = vpack.c.b16 %v486, %v484
    %v587 = vpack.c.b16 %v489, %v487
    %v588 = vpack.c.b16 %v490, %v488
    %v589 = vpack.c.b16 %v493, %v491
    %v590 = vpack.c.b16 %v494, %v492
    %687 = vmatprep.subr.bf16.mxu0 %v496
    %688 = vmatpush1.bf16.msra.mxu0 %v495
    %689 = vmatprep.subr.bf16.mxu0 %v498
    %690 = vmatpush1.bf16.msra.mxu0 %v497
    %691 = vmatprep.subr.bf16.mxu0 %v500
    %692 = vmatpush1.bf16.msra.mxu0 %v499
    %693 = vmatprep.subr.bf16.mxu0 %v502
    %694 = vmatpush1.bf16.msra.mxu0 %v501
    %695 = vmatprep.subr.bf16.mxu0 %v504
    %696 = vmatpush1.bf16.msra.mxu0 %v503
    %697 = vmatprep.subr.bf16.mxu0 %v506
    %698 = vmatpush1.bf16.msra.mxu0 %v505
    %699 = vmatprep.subr.bf16.mxu0 %v508
    %700 = vmatpush1.bf16.msra.mxu0 %v507
    %701 = vmatprep.subr.bf16.mxu0 %v510
    %702 = vmatpush1.bf16.msra.mxu0 %v509
    %703 = vmatprep.subr.bf16.mxu0 %v512
    %704 = vmatpush1.bf16.msra.mxu0 %v511
    %705 = vmatprep.subr.bf16.mxu0 %v514
    %706 = vmatpush1.bf16.msra.mxu0 %v513
    %707 = vmatprep.subr.bf16.mxu0 %v516
    %708 = vmatpush1.bf16.msra.mxu0 %v515
    %709 = vmatprep.subr.bf16.mxu0 %v518
    %710 = vmatpush1.bf16.msra.mxu0 %v517
    %711 = vmatprep.subr.bf16.mxu0 %v520
    %712 = vmatpush1.bf16.msra.mxu0 %v519
    %713 = vmatprep.subr.bf16.mxu0 %v522
    %714 = vmatpush1.bf16.msra.mxu0 %v521
    %715 = vmatprep.subr.bf16.mxu0 %v524
    %716 = vmatpush1.bf16.msra.mxu0 %v523
    %717 = vmatprep.subr.bf16.mxu0 %v526
    %718 = vmatpush1.bf16.msra.mxu0 %v525
    %719 = vmatprep.mubr.bf16.mxu0 %v196
    %720 = vmatmul.mubr.bf16.gmra.mrb[0].mxu0 %v195
    %v721 = vpop.f32.mrb[0].mxu0
    %v722 = vadd.f32 %v179, %v721
    %v723 = vpop.f32.mrb[0].mxu0
    %v724 = vadd.f32 %v183, %v723
    %v725 = vpop.f32.mrb[0].mxu0
    %v726 = vpop.f32.mrb[0].mxu0
    %727 = vdwg.mxu0
    %728 = vmatprep.subr.bf16.mxu0 %v528
    %729 = vmatpush1.bf16.msra.mxu0 %v527
    %730 = vmatprep.subr.bf16.mxu0 %v530
    %731 = vmatpush1.bf16.msra.mxu0 %v529
    %732 = vmatprep.subr.bf16.mxu0 %v532
    %733 = vmatpush1.bf16.msra.mxu0 %v531
    %734 = vmatprep.subr.bf16.mxu0 %v534
    %735 = vmatpush1.bf16.msra.mxu0 %v533
    %736 = vmatprep.subr.bf16.mxu0 %v536
    %737 = vmatpush1.bf16.msra.mxu0 %v535
    %738 = vmatprep.subr.bf16.mxu0 %v538
    %739 = vmatpush1.bf16.msra.mxu0 %v537
    %740 = vmatprep.subr.bf16.mxu0 %v540
    %741 = vmatpush1.bf16.msra.mxu0 %v539
    %742 = vmatprep.subr.bf16.mxu0 %v542
    %743 = vmatpush1.bf16.msra.mxu0 %v541
    %744 = vmatprep.subr.bf16.mxu0 %v544
    %745 = vmatpush1.bf16.msra.mxu0 %v543
    %746 = vmatprep.subr.bf16.mxu0 %v546
    %747 = vmatpush1.bf16.msra.mxu0 %v545
    %748 = vmatprep.subr.bf16.mxu0 %v548
    %749 = vmatpush1.bf16.msra.mxu0 %v547
    %750 = vmatprep.subr.bf16.mxu0 %v550
    %751 = vmatpush1.bf16.msra.mxu0 %v549
    %752 = vmatprep.subr.bf16.mxu0 %v552
    %753 = vmatpush1.bf16.msra.mxu0 %v551
    %754 = vmatprep.subr.bf16.mxu0 %v554
    %755 = vmatpush1.bf16.msra.mxu0 %v553
    %756 = vmatprep.subr.bf16.mxu0 %v556
    %757 = vmatpush1.bf16.msra.mxu0 %v555
    %758 = vmatprep.subr.bf16.mxu0 %v558
    %759 = vmatpush1.bf16.msra.mxu0 %v557
    %760 = vmatprep.mubr.bf16.mxu0 %v198
    %761 = vmatmul.mubr.bf16.gmra.mrb[0].mxu0 %v197
    %v762 = vpop.f32.mrb[0].mxu0
    %v763 = vadd.f32 %v722, %v762
    %v764 = vpop.f32.mrb[0].mxu0
    %v765 = vadd.f32 %v724, %v764
    %v766 = vpop.f32.mrb[0].mxu0
    %v767 = vpop.f32.mrb[0].mxu0
    %768 = vdwg.mxu0
    %769 = vmatprep.subr.bf16.mxu0 %v560
    %770 = vmatpush1.bf16.msra.mxu0 %v559
    %771 = vmatprep.subr.bf16.mxu0 %v562
    %772 = vmatpush1.bf16.msra.mxu0 %v561
    %773 = vmatprep.subr.bf16.mxu0 %v564
    %774 = vmatpush1.bf16.msra.mxu0 %v563
    %775 = vmatprep.subr.bf16.mxu0 %v566
    %776 = vmatpush1.bf16.msra.mxu0 %v565
    %777 = vmatprep.subr.bf16.mxu0 %v568
    %778 = vmatpush1.bf16.msra.mxu0 %v567
    %779 = vmatprep.subr.bf16.mxu0 %v570
    %780 = vmatpush1.bf16.msra.mxu0 %v569
    %781 = vmatprep.subr.bf16.mxu0 %v572
    %782 = vmatpush1.bf16.msra.mxu0 %v571
    %783 = vmatprep.subr.bf16.mxu0 %v574
    %784 = vmatpush1.bf16.msra.mxu0 %v573
    %785 = vmatprep.subr.bf16.mxu0 %v576
    %786 = vmatpush1.bf16.msra.mxu0 %v575
    %787 = vmatprep.subr.bf16.mxu0 %v578
    %788 = vmatpush1.bf16.msra.mxu0 %v577
    %789 = vmatprep.subr.bf16.mxu0 %v580
    %790 = vmatpush1.bf16.msra.mxu0 %v579
    %791 = vmatprep.subr.bf16.mxu0 %v582
    %792 = vmatpush1.bf16.msra.mxu0 %v581
    %793 = vmatprep.subr.bf16.mxu0 %v584
    %794 = vmatpush1.bf16.msra.mxu0 %v583
    %795 = vmatprep.subr.bf16.mxu0 %v586
    %796 = vmatpush1.bf16.msra.mxu0 %v585
    %797 = vmatprep.subr.bf16.mxu0 %v588
    %798 = vmatpush1.bf16.msra.mxu0 %v587
    %799 = vmatprep.subr.bf16.mxu0 %v590
    %800 = vmatpush1.bf16.msra.mxu0 %v589
    %801 = vmatprep.mubr.bf16.mxu0 %v200
    %802 = vmatmul.mubr.bf16.gmra.mrb[0].mxu0 %v199
    %v803 = vpop.f32.mrb[0].mxu0
    %v804 = vadd.f32 %v763, %v803
    %v805 = vpop.f32.mrb[0].mxu0
    %v806 = vadd.f32 %v765, %v805
    %v807 = vpop.f32.mrb[0].mxu0
    %v808 = vpop.f32.mrb[0].mxu0
    %809 = vdwg.mxu0
    %v810 = vmax.f32 %v804, 0.0
    %v811 = vmax.f32 %v806, 0.0
    %v812 = vld [vmem:[#allocation7] sm:$0xf]
    %v813 = vld [vmem:[#allocation7 + $0x4] sm:$0xf]
    %v814 = vld [vmem:[#allocation7 + $0x8] sm:$0xf]
    %v815 = vld [vmem:[#allocation7 + $0xc] sm:$0xf]
    %v816 = vld [vmem:[#allocation7 + $0x10] sm:$0xf]
    %v817 = vld [vmem:[#allocation7 + $0x14] sm:$0xf]
    %v818 = vld [vmem:[#allocation7 + $0x18] sm:$0xf]
    %v819 = vld [vmem:[#allocation7 + $0x1c] sm:$0xf]
    %v820 = vld [vmem:[#allocation7 + $0x20] sm:$0xf]
    %v821 = vld [vmem:[#allocation7 + $0x24] sm:$0xf]
    %v822 = vld [vmem:[#allocation7 + $0x28] sm:$0xf]
    %v823 = vld [vmem:[#allocation7 + $0x2c] sm:$0xf]
    %v824 = vld [vmem:[#allocation7 + $0x30] sm:$0xf]
    %v825 = vld [vmem:[#allocation7 + $0x34] sm:$0xf]
    %v826 = vld [vmem:[#allocation7 + $0x38] sm:$0xf]
    %v827 = vld [vmem:[#allocation7 + $0x3c] sm:$0xf]
    %v828 = vld [vmem:[#allocation7 + $0x40] sm:$0xf]
    %v829 = vld [vmem:[#allocation7 + $0x44] sm:$0xf]
    %v830 = vld [vmem:[#allocation7 + $0x48] sm:$0xf]
    %v831 = vld [vmem:[#allocation7 + $0x4c] sm:$0xf]
    %v832 = vld [vmem:[#allocation7 + $0x50] sm:$0xf]
    %v833 = vld [vmem:[#allocation7 + $0x54] sm:$0xf]
    %v834 = vld [vmem:[#allocation7 + $0x58] sm:$0xf]
    %v835 = vld [vmem:[#allocation7 + $0x5c] sm:$0xf]
    %v836 = vld [vmem:[#allocation7 + $0x60] sm:$0xf]
    %v837 = vld [vmem:[#allocation7 + $0x64] sm:$0xf]
    %v838 = vld [vmem:[#allocation7 + $0x68] sm:$0xf]
    %v839 = vld [vmem:[#allocation7 + $0x6c] sm:$0xf]
    %v840 = vld [vmem:[#allocation7 + $0x70] sm:$0xf]
    %v841 = vld [vmem:[#allocation7 + $0x74] sm:$0xf]
    %v842 = vld [vmem:[#allocation7 + $0x78] sm:$0xf]
    %v843 = vld [vmem:[#allocation7 + $0x7c] sm:$0xf]
    %v844 = vld [vmem:[%s4 + $0x2] sm:$0x1]
    %v845 = vpack.c.bf16 %v810, %v810
    %v846 = vpack.c.bf16 %v811, %v811
    %v848 = vlaneseq
    %v849 = vshrl.u32 %v848, 7
    %v850 = vsub.s32 0, %v849
    %v851 = vrot.slane %v844, %v850
    %v885 = vunpack.c.l.b16 %v812
    %v886 = vunpack.c.l.b16 %v813
    %v887 = vunpack.c.l.b16 %v814
    %v888 = vunpack.c.l.b16 %v815
    %v889 = vunpack.c.l.b16 %v816
    %v890 = vunpack.c.l.b16 %v817
    %v891 = vunpack.c.l.b16 %v818
    %v892 = vunpack.c.l.b16 %v819
    %v893 = vunpack.c.l.b16 %v820
    %v894 = vunpack.c.l.b16 %v821
    %v895 = vunpack.c.l.b16 %v822
    %v896 = vunpack.c.l.b16 %v823
    %v897 = vunpack.c.l.b16 %v824
    %v898 = vunpack.c.l.b16 %v825
    %v899 = vunpack.c.l.b16 %v826
    %v900 = vunpack.c.l.b16 %v827
    %v901 = vunpack.c.l.b16 %v828
    %v902 = vunpack.c.l.b16 %v829
    %v903 = vunpack.c.l.b16 %v830
    %v904 = vunpack.c.l.b16 %v831
    %v905 = vunpack.c.l.b16 %v832
    %v906 = vunpack.c.l.b16 %v833
    %v907 = vunpack.c.l.b16 %v834
    %v908 = vunpack.c.l.b16 %v835
    %v909 = vunpack.c.l.b16 %v836
    %v910 = vunpack.c.l.b16 %v837
    %v911 = vunpack.c.l.b16 %v838
    %v912 = vunpack.c.l.b16 %v839
    %v913 = vunpack.c.l.b16 %v840
    %v914 = vunpack.c.l.b16 %v841
    %v915 = vunpack.c.l.b16 %v842
    %v916 = vunpack.c.l.b16 %v843
    %v917 = vpack.c.b16 %v886, %v885
    %v918 = vpack.c.b16 %v888, %v887
    %v919 = vpack.c.b16 %v890, %v889
    %v920 = vpack.c.b16 %v892, %v891
    %v921 = vpack.c.b16 %v894, %v893
    %v922 = vpack.c.b16 %v896, %v895
    %v923 = vpack.c.b16 %v898, %v897
    %v924 = vpack.c.b16 %v900, %v899
    %v925 = vpack.c.b16 %v902, %v901
    %v926 = vpack.c.b16 %v904, %v903
    %v927 = vpack.c.b16 %v906, %v905
    %v928 = vpack.c.b16 %v908, %v907
    %v929 = vpack.c.b16 %v910, %v909
    %v930 = vpack.c.b16 %v912, %v911
    %v931 = vpack.c.b16 %v914, %v913
    %v932 = vpack.c.b16 %v916, %v915
    %949 = vmatprep.subr.bf16.mxu0 0
    %950 = vmatpush1.bf16.msra.mxu0 %v917
    %951 = vmatprep.subr.bf16.mxu0 0
    %952 = vmatpush1.bf16.msra.mxu0 %v918
    %953 = vmatprep.subr.bf16.mxu0 0
    %954 = vmatpush1.bf16.msra.mxu0 %v919
    %955 = vmatprep.subr.bf16.mxu0 0
    %956 = vmatpush1.bf16.msra.mxu0 %v920
    %957 = vmatprep.subr.bf16.mxu0 0
    %958 = vmatpush1.bf16.msra.mxu0 %v921
    %959 = vmatprep.subr.bf16.mxu0 0
    %960 = vmatpush1.bf16.msra.mxu0 %v922
    %961 = vmatprep.subr.bf16.mxu0 0
    %962 = vmatpush1.bf16.msra.mxu0 %v923
    %963 = vmatprep.subr.bf16.mxu0 0
    %964 = vmatpush1.bf16.msra.mxu0 %v924
    %965 = vmatprep.subr.bf16.mxu0 0
    %966 = vmatpush1.bf16.msra.mxu0 %v925
    %967 = vmatprep.subr.bf16.mxu0 0
    %968 = vmatpush1.bf16.msra.mxu0 %v926
    %969 = vmatprep.subr.bf16.mxu0 0
    %970 = vmatpush1.bf16.msra.mxu0 %v927
    %971 = vmatprep.subr.bf16.mxu0 0
    %972 = vmatpush1.bf16.msra.mxu0 %v928
    %973 = vmatprep.subr.bf16.mxu0 0
    %974 = vmatpush1.bf16.msra.mxu0 %v929
    %975 = vmatprep.subr.bf16.mxu0 0
    %976 = vmatpush1.bf16.msra.mxu0 %v930
    %977 = vmatprep.subr.bf16.mxu0 0
    %978 = vmatpush1.bf16.msra.mxu0 %v931
    %979 = vmatprep.subr.bf16.mxu0 0
    %980 = vmatpush1.bf16.msra.mxu0 %v932
    %981 = vmatprep.mubr.bf16.mxu0 %v846
    %982 = vmatmul.mubr.bf16.gmra.mrb[0].mxu0 %v845
    %v983 = vpop.f32.mrb[0].mxu0
    %v984 = vadd.f32 %v851, %v983
    %v985 = vpop.f32.mrb[0].mxu0
    %v986 = vpop.f32.mrb[0].mxu0
    %v987 = vpop.f32.mrb[0].mxu0
    %988 = vdwg.mxu0
    %v989 = vmax.f32 %v984, 0.0
    %v990 = vld [vmem:[#allocation8] sm:$0xf]
    %v991 = vld [vmem:[#allocation8 + $0x4] sm:$0xf]
    %v992 = vld [vmem:[#allocation8 + $0x8] sm:$0xf]
    %v993 = vld [vmem:[#allocation8 + $0xc] sm:$0xf]
    %v994 = vld [vmem:[#allocation8 + $0x10] sm:$0xf]
    %v995 = vld [vmem:[#allocation8 + $0x14] sm:$0xf]
    %v996 = vld [vmem:[#allocation8 + $0x18] sm:$0xf]
    %v997 = vld [vmem:[#allocation8 + $0x1c] sm:$0xf]
    %v998 = vld [vmem:[#allocation8 + $0x20] sm:$0xf]
    %v999 = vld [vmem:[#allocation8 + $0x24] sm:$0xf]
    %v1000 = vld [vmem:[#allocation8 + $0x28] sm:$0xf]
    %v1001 = vld [vmem:[#allocation8 + $0x2c] sm:$0xf]
    %v1002 = vld [vmem:[#allocation8 + $0x30] sm:$0xf]
    %v1003 = vld [vmem:[#allocation8 + $0x34] sm:$0xf]
    %v1004 = vld [vmem:[#allocation8 + $0x38] sm:$0xf]
    %v1005 = vld [vmem:[#allocation8 + $0x3c] sm:$0xf]
    %v1006 = vld [vmem:[%s4 + $0x3] sm:$0x1]
    %v1007 = vpack.c.bf16 %v989, %v989
    %v1009 = vlaneseq
    %v1010 = vshrl.u32 %v1009, 7
    %v1011 = vsub.s32 0, %v1010
    %v1012 = vrot.slane %v1006, %v1011
    %v1030 = vunpack.c.l.b16 %v990
    %v1031 = vunpack.c.l.b16 %v991
    %v1032 = vunpack.c.l.b16 %v992
    %v1033 = vunpack.c.l.b16 %v993
    %v1034 = vunpack.c.l.b16 %v994
    %v1035 = vunpack.c.l.b16 %v995
    %v1036 = vunpack.c.l.b16 %v996
    %v1037 = vunpack.c.l.b16 %v997
    %v1038 = vunpack.c.l.b16 %v998
    %v1039 = vunpack.c.l.b16 %v999
    %v1040 = vunpack.c.l.b16 %v1000
    %v1041 = vunpack.c.l.b16 %v1001
    %v1042 = vunpack.c.l.b16 %v1002
    %v1043 = vunpack.c.l.b16 %v1003
    %v1044 = vunpack.c.l.b16 %v1004
    %v1045 = vunpack.c.l.b16 %v1005
    %v1046 = vpack.c.b16 %v1031, %v1030
    %v1047 = vpack.c.b16 %v1033, %v1032
    %v1048 = vpack.c.b16 %v1035, %v1034
    %v1049 = vpack.c.b16 %v1037, %v1036
    %v1050 = vpack.c.b16 %v1039, %v1038
    %v1051 = vpack.c.b16 %v1041, %v1040
    %v1052 = vpack.c.b16 %v1043, %v1042
    %v1053 = vpack.c.b16 %v1045, %v1044
    %1062 = vmatprep.subr.bf16.mxu0 0
    %1063 = vmatpush1.bf16.msra.mxu0 %v1046
    %1064 = vmatprep.subr.bf16.mxu0 0
    %1065 = vmatpush1.bf16.msra.mxu0 %v1047
    %1066 = vmatprep.subr.bf16.mxu0 0
    %1067 = vmatpush1.bf16.msra.mxu0 %v1048
    %1068 = vmatprep.subr.bf16.mxu0 0
    %1069 = vmatpush1.bf16.msra.mxu0 %v1049
    %1070 = vmatprep.subr.bf16.mxu0 0
    %1071 = vmatpush1.bf16.msra.mxu0 %v1050
    %1072 = vmatprep.subr.bf16.mxu0 0
    %1073 = vmatpush1.bf16.msra.mxu0 %v1051
    %1074 = vmatprep.subr.bf16.mxu0 0
    %1075 = vmatpush1.bf16.msra.mxu0 %v1052
    %1076 = vmatprep.subr.bf16.mxu0 0
    %1077 = vmatpush1.bf16.msra.mxu0 %v1053
    %1078 = vmatprep.subr.bf16.mxu0 0
    %1079 = vmatpush1.bf16.msra.mxu0 0
    %1080 = vmatprep.subr.bf16.mxu0 0
    %1081 = vmatpush1.bf16.msra.mxu0 0
    %1082 = vmatprep.subr.bf16.mxu0 0
    %1083 = vmatpush1.bf16.msra.mxu0 0
    %1084 = vmatprep.subr.bf16.mxu0 0
    %1085 = vmatpush1.bf16.msra.mxu0 0
    %1086 = vmatprep.subr.bf16.mxu0 0
    %1087 = vmatpush1.bf16.msra.mxu0 0
    %1088 = vmatprep.subr.bf16.mxu0 0
    %1089 = vmatpush1.bf16.msra.mxu0 0
    %1090 = vmatprep.subr.bf16.mxu0 0
    %1091 = vmatpush1.bf16.msra.mxu0 0
    %1092 = vmatprep.subr.bf16.mxu0 0
    %1093 = vmatpush1.bf16.msra.mxu0 0
    %1094 = vmatprep.mubr.bf16.mxu0 0
    %1095 = vmatmul.mubr.bf16.gmra.mrb[0].mxu0 %v1007
    %v1096 = vpop.f32.mrb[0].mxu0
    %v1097 = vadd.f32 %v1012, %v1096
    %v1098 = vpop.f32.mrb[0].mxu0
    %v1099 = vpop.f32.mrb[0].mxu0
    %v1100 = vpop.f32.mrb[0].mxu0
    %1101 = vdwg.mxu0
    %1102 = vst [vmem:[#allocation10] sm:$0xff] %v1097
    // Predicated region
    $region38: #{tpu_custom_call.1} parent=1 // pred_check
      _
    $region39: #{tpu_custom_call.1} parent=1 // pred_check_branch
      %1104 = sbr.rel (0) target = $region41
    $region40: #{tpu_custom_call.1} parent=1 // pred_region
      %s1106 = ssub.s32 128, 128
      %1107 = vsyncadd [#allocation4], %s1106
      %s1109 = sshll.u32 [#allocation10], 4
      %s1110 = int_to_ptr.vmem [resolvable:$true] %s1109
      %1112 = dma.vmem_to_hbm [thread:$0]  %s1110, 128, %s5, [#allocation4]
    $region41: #{tpu_custom_call.1} parent=1 // pred_fallthru
      _
    // Predicated region
    $region42: #{tpu_custom_call.1} parent=1 // pred_check
      _
    $region43: #{tpu_custom_call.1} parent=1 // pred_check_branch
      %1114 = sbr.rel (0) target = $region45
    $region44: #{tpu_custom_call.1} parent=1 // pred_region
      %1115 = dma.done [#allocation4], 128
    $region45: #{tpu_custom_call.1} parent=1 // pred_fallthru
      _
    %1116 = vsyncpa [#allocation3], 1
    %1117 = vsyncpa [#allocation6], 1
    %1118 = vsyncpa [#allocation9], 1
    %1119 = vsyncpa [#allocation4], 1

</llo_original>
